<compile_context>
chip_gen: v5e
topology: v5e:2x2
jax: 0.10.0
libtpu: 0.0.40
codegen_flags: <defaults>
</compile_context>

<pallas_src>
import functools

import jax
import jax.numpy as jnp
from jax.experimental import pallas as pl
from jax.experimental.pallas import tpu as pltpu

LANE = 128            # TPU lane width
SUB = 8               # f32 sublanes per vreg
MAX_TILE_ROWS = 2048  # (2048,128) f32 = 1 MiB per block
NCORES = 2            # leading "parallel" grid axis (dual TC on v7x)
PAD_LOGIT = -1e30     # sigmoid -> 0, softplus -> 0, BCE (t=0) -> 0
BCE_CLAMP = 100.0     # PyTorch binary_cross_entropy clamps log() at -100


def _dice_bce_partials_kernel(tile_rows, steps_per_core, x_ref, t_ref, out_ref):
    """Accumulate per-core partial sums into a resident (1,4,8,128) output block.

    Slots along dim 1: [0] sum(p*t)  [1] sum(p)  [2] sum(t)  [3] sum(bce)
    """
    del steps_per_core  # only used by the index_maps
    i = pl.program_id(1)

    @pl.when(i == 0)
    def _init():
        out_ref[...] = jnp.zeros_like(out_ref)

    x = x_ref[...].astype(jnp.float32)
    t = t_ref[...].astype(jnp.float32)

    # Shared-exp sigmoid / softplus (1 exp + 1 log1p + 1 divide per element).
    e = jnp.exp(-jnp.abs(x))                        # EUP
    p = jnp.where(x >= 0, 1.0, e) / (1.0 + e)       # sigmoid(x)
    sp_pos = jnp.maximum(x, 0.0) + jnp.log1p(e)     # softplus(x)  = -log(1-p)
    sp_neg = sp_pos - x                             # softplus(-x) = -log(p)
    bce = (t * jnp.minimum(sp_neg, BCE_CLAMP)
           + (1.0 - t) * jnp.minimum(sp_pos, BCE_CLAMP))

    # Fold (tile_rows, 128) -> (8, 128) with pure VALU adds; the cross-lane
    # reduction happens exactly once, outside the kernel.
    def fold(v):
        return jnp.sum(v.reshape(tile_rows // SUB, SUB, LANE), axis=0)

    out_ref[0, 0] += fold(p * t)
    out_ref[0, 1] += fold(p)
    out_ref[0, 2] += fold(t)
    out_ref[0, 3] += fold(bce)


def dice_bce_loss(inputs, targets, smooth=1.0, bce_weight=0.5):
    """Pallas implementation of DiceBCELoss.forward (returns a scalar)."""
    n = inputs.size
    assert targets.size == n

    x = inputs.reshape(-1)
    t = targets.reshape(-1)

    # Tile sizing: largest tile <= MAX_TILE_ROWS, rows padded so the grid is
    # exactly NCORES * steps_per_core tiles.
    rows = pl.cdiv(n, LANE)
    rows_per_core = pl.cdiv(rows, NCORES)
    tile_rows = min(MAX_TILE_ROWS, SUB * pl.cdiv(rows_per_core, SUB))
    steps_per_core = pl.cdiv(rows, NCORES * tile_rows)
    padded_rows = NCORES * steps_per_core * tile_rows
    padded_n = padded_rows * LANE

    if padded_n != n:
        # Padding contributes zero to every accumulated sum (see PAD_LOGIT).
        x = jnp.pad(x, (0, padded_n - n), constant_values=PAD_LOGIT)
        t = jnp.pad(t, (0, padded_n - n), constant_values=0)

    # Keep the input dtype on the HBM->VMEM path (bf16 halves traffic); the
    # kernel casts to f32 after the DMA.
    x2 = x.reshape(padded_rows, LANE)
    t2 = t.reshape(padded_rows, LANE)

    kernel = functools.partial(_dice_bce_partials_kernel, tile_rows,
                               steps_per_core)

    partials = pl.pallas_call(
        kernel,
        out_shape=jax.ShapeDtypeStruct((NCORES, 4, SUB, LANE), jnp.float32),
        grid_spec=pltpu.PrefetchScalarGridSpec(
            num_scalar_prefetch=0,
            grid=(NCORES, steps_per_core),
            in_specs=[
                pl.BlockSpec((tile_rows, LANE),
                             lambda c, i: (c * steps_per_core + i, 0)),
                pl.BlockSpec((tile_rows, LANE),
                             lambda c, i: (c * steps_per_core + i, 0)),
            ],
            out_specs=pl.BlockSpec((1, 4, SUB, LANE),
                                   lambda c, i: (c, 0, 0, 0)),
        ),
        compiler_params=pltpu.CompilerParams(
            dimension_semantics=("parallel", "arbitrary")),
    )(x2, t2)

    # Tiny final reduction + scalar combine in plain JAX (4 KiB of data).
    sums = jnp.sum(partials, axis=(0, 2, 3))
    inter, sum_p, sum_t, bce_sum = sums[0], sums[1], sums[2], sums[3]

    dice_loss = 1.0 - (2.0 * inter + smooth) / (sum_p + sum_t + smooth)
    bce_mean = bce_sum / n
    return bce_mean * bce_weight + dice_loss * (1.0 - bce_weight)


def _reference(inputs, targets, smooth=1.0):
    """Mimics the PyTorch module (sigmoid + clamped-log BCE, 0.5/0.5 weights)."""
    p = jax.nn.sigmoid(inputs.astype(jnp.float32)).reshape(-1)
    t = targets.astype(jnp.float32).reshape(-1)
    inter = jnp.sum(p * t)
    dice = 1.0 - (2.0 * inter + smooth) / (jnp.sum(p) + jnp.sum(t) + smooth)
    log_p = jnp.maximum(jnp.log(p), -100.0)
    log_1mp = jnp.maximum(jnp.log(1.0 - p), -100.0)
    bce = jnp.mean(-(t * log_p + (1.0 - t) * log_1mp))
    return bce * 0.5 + dice * 0.5


if __name__ == "__main__":
    key = jax.random.PRNGKey(0)
    k1, k2, k3, k4 = jax.random.split(key, 4)

    # Test 1: NCHW segmentation-style shape, exact multiple of 1024.
    x = jax.random.normal(k1, (2, 4, 16, 16), dtype=jnp.float32)  # logits
    tgt = (jax.random.uniform(k2, (2, 4, 16, 16)) > 0.5).astype(jnp.float32)

    loss = dice_bce_loss(x, tgt, smooth=1.0)
    loss = jax.block_until_ready(loss)
    ref = _reference(x, tgt, smooth=1.0)
    assert jnp.allclose(loss, ref, rtol=1e-5, atol=1e-5), (loss, ref)

    # Test 2: odd shape (exercises the padding path).
    x_odd = jax.random.normal(k3, (2, 3, 15, 17), dtype=jnp.float32)
    tgt_odd = (jax.random.uniform(k4, (2, 3, 15, 17)) > 0.5).astype(jnp.float32)

    loss_odd = dice_bce_loss(x_odd, tgt_odd, smooth=1.0)
    loss_odd = jax.block_until_ready(loss_odd)
    ref_odd = _reference(x_odd, tgt_odd, smooth=1.0)
    assert jnp.allclose(loss_odd, ref_odd, rtol=1e-5, atol=1e-5), (loss_odd, ref_odd)

    # Test 3: bf16 logits pass through without wrapper upcast.
    loss_bf16 = dice_bce_loss(x.astype(jnp.bfloat16), tgt, smooth=1.0)
    loss_bf16 = jax.block_until_ready(loss_bf16)
    ref_bf16 = _reference(x.astype(jnp.bfloat16), tgt, smooth=1.0)
    assert jnp.allclose(loss_bf16, ref_bf16, rtol=1e-5, atol=1e-5), (loss_bf16, ref_bf16)

    print("KERNEL_OK")
</pallas_src>

<mosaic_0001>
module attributes {stable_mosaic.version = 11 : i64} {
  func.func @_dice_bce_partials_kernel(%arg0: i32, %arg1: i32, %arg2: memref<8x128xf32, #tpu.memory_space<vmem>>, %arg3: memref<8x128xf32, #tpu.memory_space<vmem>>, %arg4: memref<1x4x8x128xf32, #tpu.memory_space<vmem>>) attributes {dimension_semantics = [#tpu.dimension_semantics<parallel>, #tpu.dimension_semantics<arbitrary>], iteration_bounds = array<i64: 2, 1>, scalar_prefetch = 0 : i64, scratch_operands = 0 : i64, tpu.core_type = #tpu.core_type<tc>, window_params = [{transform_indices = @transform_0, window_bounds = array<i64: 8, 128>}, {transform_indices = @transform_1, window_bounds = array<i64: 8, 128>}, {transform_indices = @transform_2, window_bounds = array<i64: 1, 4, 8, 128>}]} {
    %c0_i32 = arith.constant 0 : i32
    %0 = arith.cmpi eq, %arg1, %c0_i32 : i32
    %1 = arith.extui %0 : i1 to i32
    %c0_i32_0 = arith.constant 0 : i32
    %2 = arith.cmpi ne, %1, %c0_i32_0 : i32
    scf.if %2 {
      %cst_44 = arith.constant 0.000000e+00 : f32
      %63 = vector.broadcast %cst_44 : f32 to vector<1x4x8x128xf32>
      %c0_45 = arith.constant 0 : index
      %c0_46 = arith.constant 0 : index
      %c0_47 = arith.constant 0 : index
      %c0_48 = arith.constant 0 : index
      %64 = vector.load %arg4[%c0_45, %c0_46, %c0_47, %c0_48] : memref<1x4x8x128xf32, #tpu.memory_space<vmem>>, vector<1x4x8x128xf32>
      tpu.vector_store %arg4[%c0_45, %c0_46, %c0_47, %c0_48], %63 {strides = array<i32>} : memref<1x4x8x128xf32, #tpu.memory_space<vmem>>, vector<1x4x8x128xf32>,
    } else {
    }
    %c0 = arith.constant 0 : index
    %c0_1 = arith.constant 0 : index
    %3 = vector.load %arg2[%c0, %c0_1] : memref<8x128xf32, #tpu.memory_space<vmem>>, vector<8x128xf32>
    %c0_2 = arith.constant 0 : index
    %c0_3 = arith.constant 0 : index
    %4 = vector.load %arg3[%c0_2, %c0_3] : memref<8x128xf32, #tpu.memory_space<vmem>>, vector<8x128xf32>
    %5 = math.absf %3 : vector<8x128xf32>
    %cst = arith.constant 0.000000e+00 : f32
    %6 = vector.broadcast %cst : f32 to vector<8x128xf32>
    %7 = arith.subf %6, %5 : vector<8x128xf32>
    %8 = math.exp %7 : vector<8x128xf32>
    %cst_4 = arith.constant 0.000000e+00 : f32
    %9 = vector.broadcast %cst_4 : f32 to vector<8x128xf32>
    %10 = arith.cmpf oge, %3, %9 : vector<8x128xf32>
    %cst_5 = arith.constant 1.000000e+00 : f32
    %11 = vector.broadcast %cst_5 : f32 to vector<8x128xf32>
    %12 = arith.select %10, %11, %8 : vector<8x128xi1>, vector<8x128xf32>
    %cst_6 = arith.constant 1.000000e+00 : f32
    %13 = vector.broadcast %cst_6 : f32 to vector<8x128xf32>
    %14 = arith.addf %13, %8 : vector<8x128xf32>
    %15 = arith.divf %12, %14 : vector<8x128xf32>
    %cst_7 = arith.constant 0.000000e+00 : f32
    %16 = vector.broadcast %cst_7 : f32 to vector<8x128xf32>
    %17 = arith.maximumf %3, %16 : vector<8x128xf32>
    %18 = math.log1p %8 : vector<8x128xf32>
    %19 = arith.addf %17, %18 : vector<8x128xf32>
    %20 = arith.subf %19, %3 : vector<8x128xf32>
    %cst_8 = arith.constant 1.000000e+02 : f32
    %21 = vector.broadcast %cst_8 : f32 to vector<8x128xf32>
    %22 = arith.minimumf %20, %21 : vector<8x128xf32>
    %23 = arith.mulf %4, %22 : vector<8x128xf32>
    %cst_9 = arith.constant 1.000000e+00 : f32
    %24 = vector.broadcast %cst_9 : f32 to vector<8x128xf32>
    %25 = arith.subf %24, %4 : vector<8x128xf32>
    %cst_10 = arith.constant 1.000000e+02 : f32
    %26 = vector.broadcast %cst_10 : f32 to vector<8x128xf32>
    %27 = arith.minimumf %19, %26 : vector<8x128xf32>
    %28 = arith.mulf %25, %27 : vector<8x128xf32>
    %29 = arith.addf %23, %28 : vector<8x128xf32>
    %c0_11 = arith.constant 0 : index
    %c0_12 = arith.constant 0 : index
    %c0_13 = arith.constant 0 : index
    %c0_14 = arith.constant 0 : index
    %30 = vector.load %arg4[%c0_11, %c0_12, %c0_13, %c0_14] : memref<1x4x8x128xf32, #tpu.memory_space<vmem>>, vector<1x1x8x128xf32>
    %31 = vector.shape_cast %30 : vector<1x1x8x128xf32> to vector<8x128xf32>
    %32 = arith.mulf %15, %4 : vector<8x128xf32>
    %33 = vector.shape_cast %32 : vector<8x128xf32> to vector<1x8x128xf32>
    %cst_15 = arith.constant dense<0.000000e+00> : vector<8x128xf32>
    %34 = vector.multi_reduction <add>, %33, %cst_15 [0] : vector<1x8x128xf32> to vector<8x128xf32>
    %35 = arith.addf %31, %34 : vector<8x128xf32>
    %c0_16 = arith.constant 0 : index
    %c0_17 = arith.constant 0 : index
    %c0_18 = arith.constant 0 : index
    %c0_19 = arith.constant 0 : index
    %36 = vector.load %arg4[%c0_16, %c0_17, %c0_18, %c0_19] : memref<1x4x8x128xf32, #tpu.memory_space<vmem>>, vector<1x1x8x128xf32>
    %37 = vector.shape_cast %36 : vector<1x1x8x128xf32> to vector<8x128xf32>
    %38 = vector.shape_cast %35 : vector<8x128xf32> to vector<1x1x8x128xf32>
    tpu.vector_store %arg4[%c0_16, %c0_17, %c0_18, %c0_19], %38 {strides = array<i32>} : memref<1x4x8x128xf32, #tpu.memory_space<vmem>>, vector<1x1x8x128xf32>,
    %c0_20 = arith.constant 0 : index
    %c1 = arith.constant 1 : index
    %c0_21 = arith.constant 0 : index
    %c0_22 = arith.constant 0 : index
    %39 = vector.load %arg4[%c0_20, %c1, %c0_21, %c0_22] : memref<1x4x8x128xf32, #tpu.memory_space<vmem>>, vector<1x1x8x128xf32>
    %40 = vector.shape_cast %39 : vector<1x1x8x128xf32> to vector<8x128xf32>
    %41 = vector.shape_cast %15 : vector<8x128xf32> to vector<1x8x128xf32>
    %cst_23 = arith.constant dense<0.000000e+00> : vector<8x128xf32>
    %42 = vector.multi_reduction <add>, %41, %cst_23 [0] : vector<1x8x128xf32> to vector<8x128xf32>
    %43 = arith.addf %40, %42 : vector<8x128xf32>
    %c0_24 = arith.constant 0 : index
    %c1_25 = arith.constant 1 : index
    %c0_26 = arith.constant 0 : index
    %c0_27 = arith.constant 0 : index
    %44 = vector.load %arg4[%c0_24, %c1_25, %c0_26, %c0_27] : memref<1x4x8x128xf32, #tpu.memory_space<vmem>>, vector<1x1x8x128xf32>
    %45 = vector.shape_cast %44 : vector<1x1x8x128xf32> to vector<8x128xf32>
    %46 = vector.shape_cast %43 : vector<8x128xf32> to vector<1x1x8x128xf32>
    tpu.vector_store %arg4[%c0_24, %c1_25, %c0_26, %c0_27], %46 {strides = array<i32>} : memref<1x4x8x128xf32, #tpu.memory_space<vmem>>, vector<1x1x8x128xf32>,
    %c0_28 = arith.constant 0 : index
    %c2 = arith.constant 2 : index
    %c0_29 = arith.constant 0 : index
    %c0_30 = arith.constant 0 : index
    %47 = vector.load %arg4[%c0_28, %c2, %c0_29, %c0_30] : memref<1x4x8x128xf32, #tpu.memory_space<vmem>>, vector<1x1x8x128xf32>
    %48 = vector.shape_cast %47 : vector<1x1x8x128xf32> to vector<8x128xf32>
    %49 = vector.shape_cast %4 : vector<8x128xf32> to vector<1x8x128xf32>
    %cst_31 = arith.constant dense<0.000000e+00> : vector<8x128xf32>
    %50 = vector.multi_reduction <add>, %49, %cst_31 [0] : vector<1x8x128xf32> to vector<8x128xf32>
    %51 = arith.addf %48, %50 : vector<8x128xf32>
    %c0_32 = arith.constant 0 : index
    %c2_33 = arith.constant 2 : index
    %c0_34 = arith.constant 0 : index
    %c0_35 = arith.constant 0 : index
    %52 = vector.load %arg4[%c0_32, %c2_33, %c0_34, %c0_35] : memref<1x4x8x128xf32, #tpu.memory_space<vmem>>, vector<1x1x8x128xf32>
    %53 = vector.shape_cast %52 : vector<1x1x8x128xf32> to vector<8x128xf32>
    %54 = vector.shape_cast %51 : vector<8x128xf32> to vector<1x1x8x128xf32>
    tpu.vector_store %arg4[%c0_32, %c2_33, %c0_34, %c0_35], %54 {strides = array<i32>} : memref<1x4x8x128xf32, #tpu.memory_space<vmem>>, vector<1x1x8x128xf32>,
    %c0_36 = arith.constant 0 : index
    %c3 = arith.constant 3 : index
    %c0_37 = arith.constant 0 : index
    %c0_38 = arith.constant 0 : index
    %55 = vector.load %arg4[%c0_36, %c3, %c0_37, %c0_38] : memref<1x4x8x128xf32, #tpu.memory_space<vmem>>, vector<1x1x8x128xf32>
    %56 = vector.shape_cast %55 : vector<1x1x8x128xf32> to vector<8x128xf32>
    %57 = vector.shape_cast %29 : vector<8x128xf32> to vector<1x8x128xf32>
    %cst_39 = arith.constant dense<0.000000e+00> : vector<8x128xf32>
    %58 = vector.multi_reduction <add>, %57, %cst_39 [0] : vector<1x8x128xf32> to vector<8x128xf32>
    %59 = arith.addf %56, %58 : vector<8x128xf32>
    %c0_40 = arith.constant 0 : index
    %c3_41 = arith.constant 3 : index
    %c0_42 = arith.constant 0 : index
    %c0_43 = arith.constant 0 : index
    %60 = vector.load %arg4[%c0_40, %c3_41, %c0_42, %c0_43] : memref<1x4x8x128xf32, #tpu.memory_space<vmem>>, vector<1x1x8x128xf32>
    %61 = vector.shape_cast %60 : vector<1x1x8x128xf32> to vector<8x128xf32>
    %62 = vector.shape_cast %59 : vector<8x128xf32> to vector<1x1x8x128xf32>
    tpu.vector_store %arg4[%c0_40, %c3_41, %c0_42, %c0_43], %62 {strides = array<i32>} : memref<1x4x8x128xf32, #tpu.memory_space<vmem>>, vector<1x1x8x128xf32>,
    return
  }
  func.func @transform_0(%arg0: i32, %arg1: i32) -> (i32, i32) {
    %c1_i32 = arith.constant 1 : i32
    %0 = arith.muli %arg0, %c1_i32 : i32
    %1 = arith.addi %0, %arg1 : i32
    %c0_i32 = arith.constant 0 : i32
    %c0_i32_0 = arith.constant 0 : i32
    return %1, %c0_i32 : i32, i32
  }
  func.func @transform_1(%arg0: i32, %arg1: i32) -> (i32, i32) {
    %c1_i32 = arith.constant 1 : i32
    %0 = arith.muli %arg0, %c1_i32 : i32
    %1 = arith.addi %0, %arg1 : i32
    %c0_i32 = arith.constant 0 : i32
    %c0_i32_0 = arith.constant 0 : i32
    return %1, %c0_i32 : i32, i32
  }
  func.func @transform_2(%arg0: i32, %arg1: i32) -> (i32, i32, i32, i32) {
    %c0_i32 = arith.constant 0 : i32
    %c0_i32_0 = arith.constant 0 : i32
    %c0_i32_1 = arith.constant 0 : i32
    %c0_i32_2 = arith.constant 0 : i32
    return %arg0, %c0_i32, %c0_i32_0, %c0_i32_1 : i32, i32, i32, i32
  }
}

</mosaic_0001>

<llo_original>
// kernel: tpu_custom_call.1
$region0: #{tpu_custom_call.1}
  #allocation0 [shape = 'u32[]', space=smem, size = 0x4, offset = 0x4, fixed_abs, tag = 'smem constant byte address 0x4 - core index']
  #allocation1 [shape = 'u32[72,128]{1,0:T(1,128)}', space=vmem, size = 0x9000, scoped, tag = 'internal scratch']
  %s0 = inlined_call_operand.hbm [shape: f32[16,128], index: 0, kind: input, shape index: {}]
  %s1 = inlined_call_operand.hbm [shape: f32[16,128], index: 1, kind: input, shape index: {}]
  %s2 = inlined_call_operand.hbm [shape: f32[2,4,8,128], index: 2, kind: output, shape index: {}]
  %s3 = sld [smem:[#allocation0]]
  $region53: #{tpu_custom_call.1} parent=0
    _
  %s5 = ssub.s32 1, %s3
  %s6 = scalar_select 0, %s5, %s3
  $region1: #{tpu_custom_call.1} parent=0
    #allocation2 [shape = 'u8[8192]{0}', space=vmem, size = 0x2000, scoped, tag = 'input window, operand 0']
    #allocation3 [shape = 's32[2]{0}', space=sflag, size = 0x8, scoped, tag = 'scoped memory for tpu_custom_call.1']
    #allocation4 [shape = 's32[2]{0}', space=sflag, size = 0x8, scoped, tag = 'scoped memory for tpu_custom_call.1']
    #allocation5 [shape = 'u8[8192]{0}', space=vmem, size = 0x2000, scoped, tag = 'input window, operand 1']
    #allocation6 [shape = 's32[2]{0}', space=sflag, size = 0x8, scoped, tag = 'scoped memory for tpu_custom_call.1']
    #allocation7 [shape = 'u8[32768]{0}', space=vmem, size = 0x8000, scoped, tag = 'output window, operand 0']
    %7 = vsyncpa [#allocation3], 0
    %s8 = scalar_lea.sflag [#allocation3], 1
    %9 = vsyncpa %s8, 0
    %10 = vsyncpa [#allocation6], 0
    %s11 = scalar_lea.sflag [#allocation6], 1
    %12 = vsyncpa %s11, 0
    %13 = vsyncpa [#allocation4], 0
    %s14 = scalar_lea.sflag [#allocation4], 1
    %15 = vsyncpa %s14, 0
    loop: start=0, step=1, limit=4
    $region2: #{tpu_custom_call.1} parent=1 // loop_pre_header
      _
    $region3: #{tpu_custom_call.1} parent=1 // loop_header
      %s17 = sphi 0, %s21
      %p18 = scmp.ge.s32.totalorder %s17, 4
      %s24 = sphi 0, %s36
      %s25 = sphi 0, %s32
      %s26 = sphi 0, %s24
      %s27 = sphi 0, %s25
      %s28 = sphi 0, %s26
      %s29 = sphi 0, %s27
      %s41 = sphi 0, %s43
      %s44 = sphi 0, %s41
      %s45 = sphi 0, %s44
      %s61 = sphi 0, %s45
      %s69 = sphi 0, %s71
      %s72 = sphi 0, %s69
      %s73 = sphi 0, %s72
      %s89 = sphi 0, %s73
      %s95 = sphi 0, %s97
      %s98 = sphi 0, %s95
      %s99 = sphi 0, %s98
      %s115 = sphi 0, %s99
    $region4: #{tpu_custom_call.1} parent=1 // loop_header_branch
      %20 = sbr.rel (%p18) target = $region8
    $region5: #{tpu_custom_call.1} parent=1 // loop_body
      %s22 = ssub.s32 %s17, 1
      %s23 = ssub.s32 %s17, 2
      %s30 = sadd.s32 1, %s25
      %p31 = scmp.ge.s32.totalorder %s30, 1
      %s32 = scalar_select %p31, 0, %s30
      %s33 = sadd.s32 1, %s24
      %s34 = scalar_select %p31, %s33, %s24
      %p35 = scmp.ge.s32.totalorder %s34, 2
      %s36 = scalar_select %p35, 0, %s34
      %s37 = sadd.s32 %s24, %s25
      %s38 = sadd.s32 %s36, %s32
      %s39 = ssub.s32 %s37, %s38
      %p40 = scmp.eq.s32.totalorder %s39, 0
      %s42 = sadd.s32 %s41, 1
      %s43 = scalar_select %p40, %s41, %s42
      %p46 = pneg %p40
      %p47 = scmp.eq.s32.totalorder %s17, 1
      %p48 = por %p46, %p47
      %p49 = scmp.ne.s32.totalorder %s41, %s44
      %p50 = scmp.eq.s32.totalorder %s17, 0
      %p51 = por %p49, %p50
      %p52 = scmp.ne.s32.totalorder %s41, %s44
      %p53 = scmp.eq.s32.totalorder %s22, 1
      %p54 = por %p52, %p53
      %p55 = scmp.ne.s32.totalorder %s44, %s45
      %p56 = scmp.eq.s32.totalorder %s22, 0
      %p57 = por %p55, %p56
      %p58 = scmp.ne.s32.totalorder %s44, %s45
      %p59 = scmp.eq.s32.totalorder %s23, 1
      %p60 = por %p58, %p59
      %p62 = scmp.ne.s32.totalorder %s45, %s61
      %p63 = scmp.eq.s32.totalorder %s23, 0
      %p64 = por %p62, %p63
      %s65 = sadd.s32 %s24, %s25
      %s66 = sadd.s32 %s36, %s32
      %s67 = ssub.s32 %s65, %s66
      %p68 = scmp.eq.s32.totalorder %s67, 0
      %s70 = sadd.s32 %s69, 1
      %s71 = scalar_select %p68, %s69, %s70
      %p74 = pneg %p68
      %p75 = scmp.eq.s32.totalorder %s17, 1
      %p76 = por %p74, %p75
      %p77 = scmp.ne.s32.totalorder %s69, %s72
      %p78 = scmp.eq.s32.totalorder %s17, 0
      %p79 = por %p77, %p78
      %p80 = scmp.ne.s32.totalorder %s69, %s72
      %p81 = scmp.eq.s32.totalorder %s22, 1
      %p82 = por %p80, %p81
      %p83 = scmp.ne.s32.totalorder %s72, %s73
      %p84 = scmp.eq.s32.totalorder %s22, 0
      %p85 = por %p83, %p84
      %p86 = scmp.ne.s32.totalorder %s72, %s73
      %p87 = scmp.eq.s32.totalorder %s23, 1
      %p88 = por %p86, %p87
      %p90 = scmp.ne.s32.totalorder %s73, %s89
      %p91 = scmp.eq.s32.totalorder %s23, 0
      %p92 = por %p90, %p91
      %s93 = ssub.s32 %s24, %s36
      %p94 = scmp.eq.s32.totalorder %s93, 0
      %s96 = sadd.s32 %s95, 1
      %s97 = scalar_select %p94, %s95, %s96
      %p100 = pneg %p94
      %p101 = scmp.eq.s32.totalorder %s17, 1
      %p102 = por %p100, %p101
      %p103 = scmp.ne.s32.totalorder %s95, %s98
      %p104 = scmp.eq.s32.totalorder %s17, 0
      %p105 = por %p103, %p104
      %p106 = scmp.ne.s32.totalorder %s95, %s98
      %p107 = scmp.eq.s32.totalorder %s22, 1
      %p108 = por %p106, %p107
      %p109 = scmp.ne.s32.totalorder %s98, %s99
      %p110 = scmp.eq.s32.totalorder %s22, 0
      %p111 = por %p109, %p110
      %p112 = scmp.ne.s32.totalorder %s98, %s99
      %p113 = scmp.eq.s32.totalorder %s23, 1
      %p114 = por %p112, %p113
      %p116 = scmp.ne.s32.totalorder %s99, %s115
      %p117 = scmp.eq.s32.totalorder %s23, 0
      %p118 = por %p116, %p117
      %p119 = scmp.le.s32.totalorder 1, %s17
      %p120 = scmp.lt.s32.totalorder %s17, 3
      %p121 = pnand %p119, %p120
      %p122 = pneg %p121
      // Predicated region
      $region9: #{tpu_custom_call.1} parent=5 // pred_check
        _
      $region10: #{tpu_custom_call.1} parent=5 // pred_check_branch
        %124 = sbr.rel (%p121) target = $region12
      $region11: #{tpu_custom_call.1} parent=5 // pred_region
        %s125 = ssub.s32 %s17, 1
      $region12: #{tpu_custom_call.1} parent=5 // pred_fallthru
        _
      %p126 = scmp.lt.s32.totalorder %s17, 2
      // Predicated region
      $region13: #{tpu_custom_call.1} parent=5 // pred_check
        %p127 = pneg %p126
      $region14: #{tpu_custom_call.1} parent=5 // pred_check_branch
        %129 = sbr.rel (%p127) target = $region16
      $region15: #{tpu_custom_call.1} parent=5 // pred_region
        // Predicated region
        $region17: #{tpu_custom_call.1} parent=15 // pred_check
          %p130 = pneg %p51
        $region18: #{tpu_custom_call.1} parent=15 // pred_check_branch
          %132 = sbr.rel (%p130) target = $region20
        $region19: #{tpu_custom_call.1} parent=15 // pred_region
          %s133 = sand.u32 %s41, 1
          %s134 = scalar_lea.sflag [#allocation3], %s133
          %s135 = sand.u32 %s41, 1
          %s136 = smul.addr %s135, 8
          %s137 = scalar_lea.vmem [#allocation2], %s136
          %s138 = sadd.s32 %s24, %s25
          %140 = vsyncadd %s134, 0
          %s141 = smul.addr %s138, 8
          %s142 = scalar_lea.hbm %s0, %s141
          %s144 = sshll.u32 %s142, 4
          %s145 = int_to_ptr.hbm [resolvable:$true] %s144
          %s146 = sshll.u32 %s137, 4
          %s147 = int_to_ptr.vmem [resolvable:$true] %s146
          %149 = dma.hbm_to_vmem [thread:$0]  %s145, 128, %s147, %s134
        $region20: #{tpu_custom_call.1} parent=15 // pred_fallthru
          _
        // Predicated region
        $region21: #{tpu_custom_call.1} parent=15 // pred_check
          %p150 = pneg %p79
        $region22: #{tpu_custom_call.1} parent=15 // pred_check_branch
          %152 = sbr.rel (%p150) target = $region24
        $region23: #{tpu_custom_call.1} parent=15 // pred_region
          %s153 = sand.u32 %s69, 1
          %s154 = scalar_lea.sflag [#allocation6], %s153
          %s155 = sand.u32 %s69, 1
          %s156 = smul.addr %s155, 8
          %s157 = scalar_lea.vmem [#allocation5], %s156
          %s158 = sadd.s32 %s24, %s25
          %160 = vsyncadd %s154, 0
          %s161 = smul.addr %s158, 8
          %s162 = scalar_lea.hbm %s1, %s161
          %s164 = sshll.u32 %s162, 4
          %s165 = int_to_ptr.hbm [resolvable:$true] %s164
          %s166 = sshll.u32 %s157, 4
          %s167 = int_to_ptr.vmem [resolvable:$true] %s166
          %169 = dma.hbm_to_vmem [thread:$0]  %s165, 128, %s167, %s154
        $region24: #{tpu_custom_call.1} parent=15 // pred_fallthru
          _
      $region16: #{tpu_custom_call.1} parent=5 // pred_fallthru
        _
      %p170 = scmp.le.s32.totalorder 1, %s17
      %p171 = scmp.lt.s32.totalorder %s17, 3
      %p172 = pnand %p170, %p171
      %p173 = pneg %p172
      // Predicated region
      $region25: #{tpu_custom_call.1} parent=5 // pred_check
        _
      $region26: #{tpu_custom_call.1} parent=5 // pred_check_branch
        %175 = sbr.rel (%p172) target = $region28
      $region27: #{tpu_custom_call.1} parent=5 // pred_region
        %s176 = ssub.s32 %s17, 1
        %s177 = sand.u32 %s44, 1
        %s178 = scalar_lea.sflag [#allocation3], %s177
        %s179 = sand.u32 %s44, 1
        %s180 = smul.addr %s179, 8
        %s181 = scalar_lea.vmem [#allocation2], %s180
        // Predicated region
        $region29: #{tpu_custom_call.1} parent=27 // pred_check
          %p182 = pneg %p57
        $region30: #{tpu_custom_call.1} parent=27 // pred_check_branch
          %184 = sbr.rel (%p182) target = $region32
        $region31: #{tpu_custom_call.1} parent=27 // pred_region
          %186 = dma.done %s178, 128
        $region32: #{tpu_custom_call.1} parent=27 // pred_fallthru
          _
        %s187 = sand.u32 %s72, 1
        %s188 = scalar_lea.sflag [#allocation6], %s187
        %s189 = sand.u32 %s72, 1
        %s190 = smul.addr %s189, 8
        %s191 = scalar_lea.vmem [#allocation5], %s190
        // Predicated region
        $region33: #{tpu_custom_call.1} parent=27 // pred_check
          %p192 = pneg %p85
        $region34: #{tpu_custom_call.1} parent=27 // pred_check_branch
          %194 = sbr.rel (%p192) target = $region36
        $region35: #{tpu_custom_call.1} parent=27 // pred_region
          %196 = dma.done %s188, 128
        $region36: #{tpu_custom_call.1} parent=27 // pred_fallthru
          _
        %s197 = sand.u32 %s44, 1
        %s198 = scalar_lea.sflag [#allocation3], %s197
        %s199 = sand.u32 %s44, 1
        %s200 = smul.addr %s199, 8
        %s201 = scalar_lea.vmem [#allocation2], %s200
        %p202 = pneg %p57
        %p203 = pneg %p54
        %s204 = sand.u32 %s72, 1
        %s205 = scalar_lea.sflag [#allocation6], %s204
        %s206 = sand.u32 %s72, 1
        %s207 = smul.addr %s206, 8
        %s208 = scalar_lea.vmem [#allocation5], %s207
        %p209 = pneg %p85
        %p210 = pneg %p82
        %p211 = pneg %p111
        %p212 = pneg %p108
        %s213 = sand.u32 %s98, 1
        %s214 = scalar_lea.sflag [#allocation4], %s213
        %s215 = sand.u32 %s98, 1
        %s216 = smul.addr %s215, 32
        %s217 = scalar_lea.vmem [#allocation7], %s216
        %s218 = sadd.s32 %s26, %s27
        %s219 = sadd.s32 %s26, %s27
        %p220 = scmp.eq.s32.totalorder %s27, 0
        // Predicated region
        $region37: #{tpu_custom_call.1} parent=27 // pred_check
          %p221 = pneg %p220
        $region38: #{tpu_custom_call.1} parent=27 // pred_check_branch
          %223 = sbr.rel (%p221) target = $region40
        $region39: #{tpu_custom_call.1} parent=27 // pred_region
          %224 = vst [vmem:[%s217] sm:$0xff] 0.0
          %225 = vst [vmem:[%s217 + $0x8] sm:$0xff] 0.0
          %226 = vst [vmem:[%s217 + $0x10] sm:$0xff] 0.0
          %227 = vst [vmem:[%s217 + $0x18] sm:$0xff] 0.0
        $region40: #{tpu_custom_call.1} parent=27 // pred_fallthru
          _
        %v228 = vld [vmem:[%s181] sm:$0xff]
        %v229 = vld [vmem:[%s191] sm:$0xff]
        %v230 = vand.u32 2147483647, %v228
        %v231 = vsub.f32 0.0, %v230
        %v232 = vmul.f32 %v231, 1.442695
        %v233 = vpow.pop %v232
        %vm234 = vcmp.ge.f32.partialorder %v228, 0.0
        %v235 = vsel %vm234, 1.0, %v233
        %v236 = vadd.f32 %v233, 1.0
        %v237 = vrcp.pop %v236
        %v238 = vmul.f32 %v236, %v237
        %v239 = vsub.f32 1.0, %v238
        %v240 = vmul.f32 %v237, %v239
        %v241 = vadd.f32 %v237, %v240
        %vm242 = vweird.f32 %v236
        %vm243 = vweird.f32 %v237
        %vm244 = vmor %vm242, %vm243
        %v245 = vsel %vm244, %v237, %v241
        %v246 = vand.u32 2147483647, %v236
        %vm247 = vcmp.eq.f32.partialorder %v246, 8.507059e+37
        %v248 = vand.u32 %v236, 2147483648
        %v249 = vor.u32 1.1754944e-38, %v248
        %v250 = vsel %vm247, %v249, %v245
        %v251 = vmul.f32 %v235, %v250
        %v252 = vmax.f32 %v228, 0.0
        %v253 = vadd.f32 %v233, 1.0
        %v254 = vlog2.pop %v253
        %v255 = vmul.f32 %v254, 0.6931472
        %v256 = vmul.f32 -0.5, %v233
        %v257 = vadd.f32 %v256, 1.0
        %v258 = vmul.f32 %v257, %v233
        %v259 = vand.u32 2147483647, %v233
        %vm260 = vcmp.lt.f32.partialorder %v259, 0.0004427343
        %v261 = vsel %vm260, %v258, %v255
        %v262 = vadd.f32 %v252, %v261
        %v263 = vsub.f32 %v262, %v228
        %v264 = vmin.f32 %v263, 100.0
        %v265 = vmul.f32 %v229, %v264
        %v266 = vsub.f32 1.0, %v229
        %v267 = vmin.f32 %v262, 100.0
        %v268 = vmul.f32 %v266, %v267
        %v269 = vadd.f32 %v265, %v268
        %v270 = vld [vmem:[%s217] sm:$0xff]
        %v271 = vmul.f32 %v251, %v229
        %v272 = vadd.f32 %v271, 0.0
        %v273 = vadd.f32 %v270, %v272
        %274 = vst [vmem:[%s217] sm:$0xff] %v273
        %s275 = scalar_lea.vmem %s217, 8 [#allocation7]
        %v276 = vld [vmem:[%s275] sm:$0xff]
        %v277 = vadd.f32 %v251, 0.0
        %v278 = vadd.f32 %v276, %v277
        %279 = vst [vmem:[%s275] sm:$0xff] %v278
        %s280 = scalar_lea.vmem %s217, 16 [#allocation7]
        %v281 = vld [vmem:[%s280] sm:$0xff]
        %v282 = vadd.f32 %v229, 0.0
        %v283 = vadd.f32 %v281, %v282
        %284 = vst [vmem:[%s280] sm:$0xff] %v283
        %s285 = scalar_lea.vmem %s217, 24 [#allocation7]
        %v286 = vld [vmem:[%s285] sm:$0xff]
        %v287 = vadd.f32 %v269, 0.0
        %v288 = vadd.f32 %v286, %v287
        %289 = vst [vmem:[%s285] sm:$0xff] %v288
        %s290 = sand.u32 %s98, 1
        %s291 = scalar_lea.sflag [#allocation4], %s290
        %s292 = sand.u32 %s98, 1
        %s293 = smul.addr %s292, 32
        %s294 = scalar_lea.vmem [#allocation7], %s293
        // Predicated region
        $region41: #{tpu_custom_call.1} parent=27 // pred_check
          %p295 = pneg %p108
        $region42: #{tpu_custom_call.1} parent=27 // pred_check_branch
          %297 = sbr.rel (%p295) target = $region44
        $region43: #{tpu_custom_call.1} parent=27 // pred_region
          %299 = vsyncadd %s291, 0
          %s300 = smul.addr %s26, 4
          %s301 = smul.addr %s300, 8
          %s302 = scalar_lea.hbm %s2, %s301
          %s303 = sshll.u32 %s294, 4
          %s304 = int_to_ptr.vmem [resolvable:$true] %s303
          %s305 = sshll.u32 %s302, 4
          %s306 = int_to_ptr.hbm [resolvable:$true] %s305
          %311 = dma.vmem_to_hbm [thread:$0]  %s304, 512, %s306, %s291, 128, 128, 8
        $region44: #{tpu_custom_call.1} parent=27 // pred_fallthru
          _
      $region28: #{tpu_custom_call.1} parent=5 // pred_fallthru
        _
      %p312 = scmp.le.s32.totalorder 2, %s17
      // Predicated region
      $region45: #{tpu_custom_call.1} parent=5 // pred_check
        %p313 = pneg %p312
      $region46: #{tpu_custom_call.1} parent=5 // pred_check_branch
        %315 = sbr.rel (%p313) target = $region48
      $region47: #{tpu_custom_call.1} parent=5 // pred_region
        %s316 = ssub.s32 %s17, 2
        // Predicated region
        $region49: #{tpu_custom_call.1} parent=47 // pred_check
          %p317 = pneg %p114
        $region50: #{tpu_custom_call.1} parent=47 // pred_check_branch
          %319 = sbr.rel (%p317) target = $region52
        $region51: #{tpu_custom_call.1} parent=47 // pred_region
          %s320 = sand.u32 %s99, 1
          %s321 = scalar_lea.sflag [#allocation4], %s320
          %s322 = sand.u32 %s99, 1
          %s323 = smul.addr %s322, 32
          %s324 = scalar_lea.vmem [#allocation7], %s323
          %326 = dma.done %s321, 512
        $region52: #{tpu_custom_call.1} parent=47 // pred_fallthru
          _
      $region48: #{tpu_custom_call.1} parent=5 // pred_fallthru
        _
    $region6: #{tpu_custom_call.1} parent=1 // loop_footer
      %s21 = sadd.s32 1, %s17
    $region7: #{tpu_custom_call.1} parent=1 // loop_footer_branch
      %16 = sbr.rel target = $region3
    $region8: #{tpu_custom_call.1} parent=1 // loop_exit
      _
    %327 = vsyncpa [#allocation3], 1
    %s328 = scalar_lea.sflag [#allocation3], 1
    %329 = vsyncpa %s328, 1
    %330 = vsyncpa [#allocation6], 1
    %s331 = scalar_lea.sflag [#allocation6], 1
    %332 = vsyncpa %s331, 1
    %333 = vsyncpa [#allocation4], 1
    %s334 = scalar_lea.sflag [#allocation4], 1
    %335 = vsyncpa %s334, 1

</llo_original>
